<compile_context>
chip_gen: v7x
topology: tpu7x:2x2x1
jax: 0.10.0
libtpu: 0.0.40
codegen_flags: <defaults>
</compile_context>

<pallas_src>
import functools
import math

import jax
import jax.numpy as jnp
from jax.experimental import pallas as pl
from jax.experimental.pallas import tpu as pltpu

_NEG_BIG = -9e15  # same masking constant as the PyTorch reference


def _round_up(v, m):
    return ((v + m - 1) // m) * m


def _tpu_vmem_capacity_bytes():
    """Best-effort physical VMEM per core; conservative (v7x) fallback."""
    try:
        info = pltpu.get_tpu_info()
        cap = getattr(info, "vmem_capacity_bytes", None)
        if cap:
            return int(cap)
    except Exception:
        pass
    return 64 * 1024 * 1024


# ----------------------------- stage 1 --------------------------------------
def _project_kernel(x_ref, w_ref, a1_ref, a2_ref, h_ref, f1_ref, f2_ref):
    """h = x @ W (bf16 MXU, f32 acc) + attention projections f1 / f2 (VPU)."""
    h32 = jnp.dot(x_ref[...], w_ref[...], preferred_element_type=jnp.float32)
    h_ref[...] = h32.astype(h_ref.dtype)
    # f1[i] = h[i].a1  and  f2[j] = h[j].a2, both stored LANE-DENSE as rows
    # (full vst, no (TILE_M, 1) masked partial stores); one XLU transpose each.
    f1_ref[...] = jnp.sum(h32 * a1_ref[...], axis=-1, keepdims=True).T
    f2_ref[...] = jnp.sum(h32 * a2_ref[...], axis=-1, keepdims=True).T


# ----------------------------- stage 2 --------------------------------------
def _attn_kernel(f1_ref, f2_ref, mask_ref, h_ref, out_ref,
                 m_ref, l_ref, acc_ref, *, alpha, concat):
    """Online-softmax attention over key tiles; grid = (row_tile, key_tile)."""
    k = pl.program_id(1)

    @pl.when(k == 0)
    def _init():
        m_ref[...] = jnp.full_like(m_ref, -jnp.inf)
        l_ref[...] = jnp.zeros_like(l_ref)
        acc_ref[...] = jnp.zeros_like(acc_ref)

    # e[i, j] = LeakyReLU(f1[i] + f2[j]); f1 arrives lane-dense, one small
    # XLU transpose per step turns it back into a column.
    e = f1_ref[...].T + f2_ref[...]                      # (TILE_M, TILE_N)
    e = jnp.maximum(e, alpha * e)                        # LeakyReLU (alpha < 1)
    # Adjacency as int8 0/1: 1 cmp + 1 select on the VPU (which has slack).
    masked = jnp.where(mask_ref[...] > 0, e, _NEG_BIG)

    m_prev = m_ref[...]
    m_new = jnp.maximum(m_prev, jnp.max(masked, axis=1, keepdims=True))
    scale = jnp.exp(m_prev - m_new)
    p = jnp.exp(masked - m_new)                          # unnormalized probs
    l_ref[...] = scale * l_ref[...] + jnp.sum(p, axis=1, keepdims=True)
    # Deferred normalization: matmul the unnormalized p, scale at finalize.
    acc_ref[...] = scale * acc_ref[...] + jnp.dot(
        p.astype(jnp.bfloat16), h_ref[...], preferred_element_type=jnp.float32)
    m_ref[...] = m_new

    @pl.when(k == pl.num_programs(1) - 1)
    def _finalize():
        out = acc_ref[...] * pl.reciprocal(l_ref[...], approx=True)
        if concat:
            # ELU; clamp the exp argument so the discarded branch stays finite.
            out = jnp.where(out > 0, out, jnp.exp(jnp.minimum(out, 0.0)) - 1.0)
        out_ref[...] = out.astype(out_ref.dtype)


# ----------------------------- wrapper ---------------------------------------
def gat_layer(x, W, a, adj, *, alpha=0.2, concat=True,
              tile_m=None, tile_n=None, vmem_limit_bytes=None):
    """Pallas forward of MyGraphAttentionLayer (dropout = 0 / eval mode).

    x:   (N, in_features) float32
    W:   (in_features, out_features) float32
    a:   (2*out_features, 1) float32
    adj: (N, N) float32 dense adjacency (with self loops)
    """
    N, Fin = x.shape
    Fout = W.shape[1]

    # Generation-aware defaults: v7x has 64 MiB VMEM/TC -> smaller tiles and
    # limit; v5e/v6e (128 MiB) -> bigger row tiles amortize grid overhead.
    cap = _tpu_vmem_capacity_bytes()
    big_vmem = cap >= 96 * 1024 * 1024
    if vmem_limit_bytes is None:
        vmem_limit_bytes = min(int(cap * 3 // 4), 100 * 1024 * 1024)
    if tile_m is None:
        tile_m = 256 if big_vmem else 128
    if tile_n is None:
        tile_n = 256 if big_vmem else 128

    # Padded sizes: lane-dense output features; N padded so both tile sizes
    # divide it (tiles clamped for small graphs to avoid silly padding).
    Fout_pad = _round_up(Fout, 128)
    TILE_M = min(_round_up(tile_m, 128), _round_up(N, 128))
    TILE_N = min(_round_up(tile_n, 128), _round_up(N, 128))
    N_pad = _round_up(N, math.lcm(TILE_M, TILE_N))
    n_row_tiles = N_pad // TILE_M
    n_key_tiles = N_pad // TILE_N

    # --- wrapper-side padding / dtype prep (plain JAX glue, target dtypes) ---
    x_p = jnp.zeros((N_pad, Fin), jnp.bfloat16).at[:N].set(x.astype(jnp.bfloat16))
    W_p = jnp.zeros((Fin, Fout_pad), jnp.bfloat16).at[:, :Fout].set(
        W.astype(jnp.bfloat16))
    a1_row = jnp.zeros((1, Fout_pad), jnp.float32).at[0, :Fout].set(a[:Fout, 0])
    a2_row = jnp.zeros((1, Fout_pad), jnp.float32).at[0, :Fout].set(a[Fout:, 0])
    # int8 0/1 edge mask (padding rows / cols stay 0 -> fully masked).
    mask = jnp.zeros((N_pad, N_pad), jnp.int8).at[:N, :N].set(
        (adj > 0).astype(jnp.int8))

    # --- stage 1: projection h = x @ W, plus lane-dense f1 / f2 rows ---
    h16, f1, f2 = pl.pallas_call(
        _project_kernel,
        out_shape=(jax.ShapeDtypeStruct((N_pad, Fout_pad), jnp.bfloat16),
                   jax.ShapeDtypeStruct((1, N_pad), jnp.float32),
                   jax.ShapeDtypeStruct((1, N_pad), jnp.float32)),
        grid=(n_row_tiles,),
        in_specs=[
            pl.BlockSpec((TILE_M, Fin), lambda i: (i, 0)),
            pl.BlockSpec((Fin, Fout_pad), lambda i: (0, 0)),
            pl.BlockSpec((1, Fout_pad), lambda i: (0, 0)),
            pl.BlockSpec((1, Fout_pad), lambda i: (0, 0)),
        ],
        out_specs=(
            pl.BlockSpec((TILE_M, Fout_pad), lambda i: (i, 0)),
            pl.BlockSpec((1, TILE_M), lambda i: (0, i)),
            pl.BlockSpec((1, TILE_M), lambda i: (0, i)),
        ),
        compiler_params=pltpu.CompilerParams(
            dimension_semantics=("parallel",),
            vmem_limit_bytes=vmem_limit_bytes),
        cost_estimate=pl.CostEstimate(
            flops=2 * N_pad * Fin * Fout_pad + 4 * N_pad * Fout_pad,
            transcendentals=0,
            bytes_accessed=(2 * N_pad * Fin + 2 * Fin * Fout_pad
                            + 2 * N_pad * Fout_pad + 8 * N_pad)),
    )(x_p, W_p, a1_row, a2_row)

    # --- stage 2: masked online softmax + attention @ h, tiled over (q, k) ---
    kernel = functools.partial(_attn_kernel, alpha=float(alpha),
                               concat=bool(concat))
    out_pad = pl.pallas_call(
        kernel,
        out_shape=jax.ShapeDtypeStruct((N_pad, Fout_pad), jnp.float32),
        grid=(n_row_tiles, n_key_tiles),
        in_specs=[
            pl.BlockSpec((1, TILE_M), lambda i, k: (0, i)),        # f1 row
            pl.BlockSpec((1, TILE_N), lambda i, k: (0, k)),        # f2 row
            pl.BlockSpec((TILE_M, TILE_N), lambda i, k: (i, k)),   # int8 mask
            pl.BlockSpec((TILE_N, Fout_pad), lambda i, k: (k, 0)), # h key tile
        ],
        out_specs=pl.BlockSpec((TILE_M, Fout_pad), lambda i, k: (i, 0)),
        scratch_shapes=[pltpu.VMEM((TILE_M, 1), jnp.float32),       # m
                        pltpu.VMEM((TILE_M, 1), jnp.float32),       # l
                        pltpu.VMEM((TILE_M, Fout_pad), jnp.float32)],  # acc
        compiler_params=pltpu.CompilerParams(
            dimension_semantics=("parallel", "arbitrary"),
            vmem_limit_bytes=vmem_limit_bytes),
        cost_estimate=pl.CostEstimate(
            flops=2 * N_pad * N_pad * Fout_pad + 12 * N_pad * N_pad,
            transcendentals=N_pad * N_pad,
            bytes_accessed=(N_pad * N_pad                      # int8 mask
                            + n_row_tiles * N_pad * Fout_pad * 2  # h re-reads
                            + N_pad * Fout_pad * 4             # output
                            + 8 * N_pad)),
    )(f1, f2, mask, h16)

    return out_pad[:N, :Fout]


# ----------------------------- helpers (plain-JAX glue) ----------------------
def build_adj(edge_index, N):
    """Dense adjacency from (2, E) edge_index, plus self-loops."""
    adj = jnp.zeros((N, N), jnp.float32)
    adj = adj.at[edge_index[0], edge_index[1]].set(1.0)
    adj = adj.at[jnp.arange(N), jnp.arange(N)].set(1.0)
    return adj


def xavier_uniform(key, shape, gain):
    fan_in, fan_out = shape[0], shape[1]
    bound = gain * jnp.sqrt(6.0 / (fan_in + fan_out))
    return jax.random.uniform(key, shape, jnp.float32, -bound, bound)


if __name__ == "__main__":
    # Small deterministic setup: N=8 nodes, in_features=16, out_features=32.
    key = jax.random.PRNGKey(0)
    k_x, k_w, k_a, _ = jax.random.split(key, 4)

    N, Fin, Fout = 8, 16, 32
    alpha = 0.2  # LeakyReLU negative slope

    x = jax.random.normal(k_x, (N, Fin), jnp.float32)
    W = xavier_uniform(k_w, (Fin, Fout), gain=1.414)
    a = xavier_uniform(k_a, (2 * Fout, 1), gain=1.414)

    # Deterministic edge list (2, E)
    src = jnp.array([0, 1, 2, 3, 4, 5, 6, 7, 0, 2, 4, 6], jnp.int32)
    dst = jnp.array([1, 2, 3, 4, 5, 6, 7, 0, 4, 6, 0, 2], jnp.int32)
    edge_index = jnp.stack([src, dst], axis=0)

    adj = build_adj(edge_index, N)

    out = gat_layer(x, W, a, adj, alpha=alpha, concat=True)
    out = jax.block_until_ready(out)

    # Pure-JAX reference mirroring the kernel's precision policy (bf16 matmul
    # inputs, f32 accumulation, deferred softmax normalization) — same math
    # as the PyTorch forward with dropout = 0.
    bf = jnp.bfloat16
    h32 = jnp.dot(x.astype(bf), W.astype(bf), preferred_element_type=jnp.float32)
    f1_r = jnp.sum(h32 * a[:Fout, 0][None, :], axis=-1, keepdims=True)
    f2_r = jnp.sum(h32 * a[Fout:, 0][None, :], axis=-1, keepdims=True).T
    e_r = f1_r + f2_r
    e_r = jnp.maximum(e_r, alpha * e_r)
    masked_r = jnp.where(adj > 0, e_r, _NEG_BIG)
    row_max = jnp.max(masked_r, axis=1, keepdims=True)
    p_r = jnp.exp(masked_r - row_max)
    denom = jnp.sum(p_r, axis=1, keepdims=True)
    hp_r = jnp.dot(p_r.astype(bf), h32.astype(bf),
                   preferred_element_type=jnp.float32) / denom
    ref = jnp.where(hp_r > 0, hp_r, jnp.exp(jnp.minimum(hp_r, 0.0)) - 1.0)

    assert out.shape == (N, Fout)
    err = float(jnp.max(jnp.abs(out - ref)))
    assert jnp.allclose(out, ref, atol=1e-2, rtol=1e-2), err
    print("KERNEL_OK")
</pallas_src>

<mosaic_0001>
module attributes {stable_mosaic.version = 11 : i64} {
  func.func @_project_kernel(%arg0: i32, %arg1: memref<128x16xbf16, #tpu.memory_space<vmem>>, %arg2: memref<16x128xbf16, #tpu.memory_space<vmem>>, %arg3: memref<1x128xf32, #tpu.memory_space<vmem>>, %arg4: memref<1x128xf32, #tpu.memory_space<vmem>>, %arg5: memref<128x128xbf16, #tpu.memory_space<vmem>>, %arg6: memref<1x128xf32, #tpu.memory_space<vmem>>, %arg7: memref<1x128xf32, #tpu.memory_space<vmem>>) attributes {dimension_semantics = [#tpu.dimension_semantics<parallel>], iteration_bounds = array<i64: 1>, scalar_prefetch = 0 : i64, scratch_operands = 0 : i64, tpu.core_type = #tpu.core_type<tc>, window_params = [{transform_indices = @transform_0, window_bounds = array<i64: 128, 16>}, {pipeline_mode = #tpu.pipeline_mode<synchronous>, transform_indices = @transform_1, window_bounds = array<i64: 16, 128>}, {pipeline_mode = #tpu.pipeline_mode<synchronous>, transform_indices = @transform_2, window_bounds = array<i64: 1, 128>}, {pipeline_mode = #tpu.pipeline_mode<synchronous>, transform_indices = @transform_3, window_bounds = array<i64: 1, 128>}, {transform_indices = @transform_4, window_bounds = array<i64: 128, 128>}, {transform_indices = @transform_5, window_bounds = array<i64: 1, 128>}, {transform_indices = @transform_6, window_bounds = array<i64: 1, 128>}]} {
    %c0 = arith.constant 0 : index
    %c0_0 = arith.constant 0 : index
    %0 = vector.load %arg1[%c0, %c0_0] : memref<128x16xbf16, #tpu.memory_space<vmem>>, vector<128x16xbf16>
    %c0_1 = arith.constant 0 : index
    %c0_2 = arith.constant 0 : index
    %1 = vector.load %arg2[%c0_1, %c0_2] : memref<16x128xbf16, #tpu.memory_space<vmem>>, vector<16x128xbf16>
    %cst = arith.constant dense<0.000000e+00> : vector<128x128xf32>
    %2 = tpu.matmul %0, %1, %cst {dimension_numbers = #tpu.dot_dimension_numbers<[1], [0], [0], [1], [0, 0, 1, 1], [], []>} : vector<128x16xbf16>, vector<16x128xbf16>, vector<128x128xf32> -> vector<128x128xf32>
    %3 = arith.truncf %2 : vector<128x128xf32> to vector<128x128xbf16>
    %c0_3 = arith.constant 0 : index
    %c0_4 = arith.constant 0 : index
    %4 = vector.load %arg5[%c0_3, %c0_4] : memref<128x128xbf16, #tpu.memory_space<vmem>>, vector<128x128xbf16>
    tpu.vector_store %arg5[%c0_3, %c0_4], %3 {strides = array<i32>} : memref<128x128xbf16, #tpu.memory_space<vmem>>, vector<128x128xbf16>,
    %c0_5 = arith.constant 0 : index
    %c0_6 = arith.constant 0 : index
    %5 = vector.load %arg3[%c0_5, %c0_6] : memref<1x128xf32, #tpu.memory_space<vmem>>, vector<1x128xf32>
    %6 = vector.broadcast %5 : vector<1x128xf32> to vector<128x128xf32>
    %7 = arith.mulf %2, %6 : vector<128x128xf32>
    %cst_7 = arith.constant dense<0.000000e+00> : vector<128xf32>
    %8 = vector.multi_reduction <add>, %7, %cst_7 [1] : vector<128x128xf32> to vector<128xf32>
    %9 = vector.shape_cast %8 : vector<128xf32> to vector<128x1xf32>
    %10 = tpu.transpose %9, [1, 0] : vector<128x1xf32> -> vector<1x128xf32>
    %c0_8 = arith.constant 0 : index
    %c0_9 = arith.constant 0 : index
    %11 = vector.load %arg6[%c0_8, %c0_9] : memref<1x128xf32, #tpu.memory_space<vmem>>, vector<1x128xf32>
    tpu.vector_store %arg6[%c0_8, %c0_9], %10 {strides = array<i32>} : memref<1x128xf32, #tpu.memory_space<vmem>>, vector<1x128xf32>,
    %c0_10 = arith.constant 0 : index
    %c0_11 = arith.constant 0 : index
    %12 = vector.load %arg4[%c0_10, %c0_11] : memref<1x128xf32, #tpu.memory_space<vmem>>, vector<1x128xf32>
    %13 = vector.broadcast %12 : vector<1x128xf32> to vector<128x128xf32>
    %14 = arith.mulf %2, %13 : vector<128x128xf32>
    %cst_12 = arith.constant dense<0.000000e+00> : vector<128xf32>
    %15 = vector.multi_reduction <add>, %14, %cst_12 [1] : vector<128x128xf32> to vector<128xf32>
    %16 = vector.shape_cast %15 : vector<128xf32> to vector<128x1xf32>
    %17 = tpu.transpose %16, [1, 0] : vector<128x1xf32> -> vector<1x128xf32>
    %c0_13 = arith.constant 0 : index
    %c0_14 = arith.constant 0 : index
    %18 = vector.load %arg7[%c0_13, %c0_14] : memref<1x128xf32, #tpu.memory_space<vmem>>, vector<1x128xf32>
    tpu.vector_store %arg7[%c0_13, %c0_14], %17 {strides = array<i32>} : memref<1x128xf32, #tpu.memory_space<vmem>>, vector<1x128xf32>,
    return
  }
  func.func @transform_0(%arg0: i32) -> (i32, i32) {
    %c0_i32 = arith.constant 0 : i32
    %c0_i32_0 = arith.constant 0 : i32
    return %arg0, %c0_i32 : i32, i32
  }
  func.func @transform_1(%arg0: i32) -> (i32, i32) {
    %c0_i32 = arith.constant 0 : i32
    %c0_i32_0 = arith.constant 0 : i32
    %c0_i32_1 = arith.constant 0 : i32
    return %c0_i32, %c0_i32_0 : i32, i32
  }
  func.func @transform_2(%arg0: i32) -> (i32, i32) {
    %c0_i32 = arith.constant 0 : i32
    %c0_i32_0 = arith.constant 0 : i32
    %c0_i32_1 = arith.constant 0 : i32
    return %c0_i32, %c0_i32_0 : i32, i32
  }
  func.func @transform_3(%arg0: i32) -> (i32, i32) {
    %c0_i32 = arith.constant 0 : i32
    %c0_i32_0 = arith.constant 0 : i32
    %c0_i32_1 = arith.constant 0 : i32
    return %c0_i32, %c0_i32_0 : i32, i32
  }
  func.func @transform_4(%arg0: i32) -> (i32, i32) {
    %c0_i32 = arith.constant 0 : i32
    %c0_i32_0 = arith.constant 0 : i32
    return %arg0, %c0_i32 : i32, i32
  }
  func.func @transform_5(%arg0: i32) -> (i32, i32) {
    %c0_i32 = arith.constant 0 : i32
    %c0_i32_0 = arith.constant 0 : i32
    return %c0_i32, %arg0 : i32, i32
  }
  func.func @transform_6(%arg0: i32) -> (i32, i32) {
    %c0_i32 = arith.constant 0 : i32
    %c0_i32_0 = arith.constant 0 : i32
    return %c0_i32, %arg0 : i32, i32
  }
}

</mosaic_0001>

<llo_original>
// kernel: tpu_custom_call.1
$region0: #{tpu_custom_call.1}
  #allocation0 [shape = 'u32[]', space=smem, size = 0x4, offset = 0x4, fixed_abs, tag = 'smem constant byte address 0x4 - core index']
  #allocation1 [shape = 'u32[144,128]{1,0:T(1,128)}', space=vmem, size = 0x12000, scoped, tag = 'internal scratch']
  %s0 = inlined_call_operand.vmem [shape: bf16[128,16], index: 0, kind: input, shape index: {}]
  %s1 = inlined_call_operand.vmem [shape: bf16[16,128], index: 1, kind: input, shape index: {}]
  %s2 = inlined_call_operand.vmem [shape: f32[1,128], index: 2, kind: input, shape index: {}]
  %s3 = inlined_call_operand.vmem [shape: f32[1,128], index: 3, kind: input, shape index: {}]
  %s4 = inlined_call_operand.hbm [shape: bf16[128,128], index: 4, kind: output, shape index: {0}]
  %s5 = inlined_call_operand.hbm [shape: f32[1,128], index: 5, kind: output, shape index: {1}]
  %s6 = inlined_call_operand.hbm [shape: f32[1,128], index: 6, kind: output, shape index: {2}]
  %7 = xla_tuple %s4, %s5, %s6
  %s8 = sld [smem:[#allocation0]]
  $region42: #{tpu_custom_call.1} parent=0
    _
  %s10 = ssub.s32 1, %s8
  %s11 = scalar_select 0, %s10, %s8
  $region1: #{tpu_custom_call.1} parent=0
    #allocation2 [shape = 'u8[32768]{0}', space=vmem, size = 0x8000, scoped, tag = 'output window, operand 0, single buffered']
    #allocation3 [shape = 's32[1]{0}', space=sflag, size = 0x4, scoped, tag = 'scoped memory for tpu_custom_call.1']
    #allocation4 [shape = 'u8[512]{0}', space=vmem, size = 0x400, scoped, tag = 'output window, operand 1, single buffered']
    #allocation5 [shape = 's32[1]{0}', space=sflag, size = 0x4, scoped, tag = 'scoped memory for tpu_custom_call.1']
    #allocation6 [shape = 'u8[512]{0}', space=vmem, size = 0x400, scoped, tag = 'output window, operand 2, single buffered']
    %12 = vsyncpa [#allocation3], 0
    %13 = vsyncpa [#allocation5], 0
    // Predicated region
    $region2: #{tpu_custom_call.1} parent=1 // pred_check
      _
    $region3: #{tpu_custom_call.1} parent=1 // pred_check_branch
      %15 = sbr.rel (0) target = $region5
    $region4: #{tpu_custom_call.1} parent=1 // pred_region
      _
    $region5: #{tpu_custom_call.1} parent=1 // pred_fallthru
      _
    // Predicated region
    $region6: #{tpu_custom_call.1} parent=1 // pred_check
      _
    $region7: #{tpu_custom_call.1} parent=1 // pred_check_branch
      %17 = sbr.rel (0) target = $region9
    $region8: #{tpu_custom_call.1} parent=1 // pred_region
      _
    $region9: #{tpu_custom_call.1} parent=1 // pred_fallthru
      _
    // Predicated region
    $region10: #{tpu_custom_call.1} parent=1 // pred_check
      _
    $region11: #{tpu_custom_call.1} parent=1 // pred_check_branch
      %19 = sbr.rel (0) target = $region13
    $region12: #{tpu_custom_call.1} parent=1 // pred_region
      _
    $region13: #{tpu_custom_call.1} parent=1 // pred_fallthru
      _
    // Predicated region
    $region14: #{tpu_custom_call.1} parent=1 // pred_check
      _
    $region15: #{tpu_custom_call.1} parent=1 // pred_check_branch
      %21 = sbr.rel (0) target = $region17
    $region16: #{tpu_custom_call.1} parent=1 // pred_region
      _
    $region17: #{tpu_custom_call.1} parent=1 // pred_fallthru
      _
    %v23 = vld [vmem:[%s0] sm:$0xf]
    %v24 = vld [vmem:[%s0 + $0x4] sm:$0xf]
    %v25 = vld [vmem:[%s0 + $0x8] sm:$0xf]
    %v26 = vld [vmem:[%s0 + $0xc] sm:$0xf]
    %v27 = vld [vmem:[%s0 + $0x10] sm:$0xf]
    %v28 = vld [vmem:[%s0 + $0x14] sm:$0xf]
    %v29 = vld [vmem:[%s0 + $0x18] sm:$0xf]
    %v30 = vld [vmem:[%s0 + $0x1c] sm:$0xf]
    %v31 = vld [vmem:[%s0 + $0x20] sm:$0xf]
    %v32 = vld [vmem:[%s0 + $0x24] sm:$0xf]
    %v33 = vld [vmem:[%s0 + $0x28] sm:$0xf]
    %v34 = vld [vmem:[%s0 + $0x2c] sm:$0xf]
    %v35 = vld [vmem:[%s0 + $0x30] sm:$0xf]
    %v36 = vld [vmem:[%s0 + $0x34] sm:$0xf]
    %v37 = vld [vmem:[%s0 + $0x38] sm:$0xf]
    %v38 = vld [vmem:[%s0 + $0x3c] sm:$0xf]
    %v39 = vld [vmem:[%s1] sm:$0xf]
    %v40 = vld [vmem:[%s1 + $0x4] sm:$0xf]
    %v57 = vunpack.c.l.b16 %v23
    %v58 = vunpack.c.l.b16 %v24
    %v59 = vunpack.c.l.b16 %v25
    %v60 = vunpack.c.l.b16 %v26
    %v61 = vunpack.c.l.b16 %v27
    %v62 = vunpack.c.l.b16 %v28
    %v63 = vunpack.c.l.b16 %v29
    %v64 = vunpack.c.l.b16 %v30
    %v65 = vunpack.c.l.b16 %v31
    %v66 = vunpack.c.l.b16 %v32
    %v67 = vunpack.c.l.b16 %v33
    %v68 = vunpack.c.l.b16 %v34
    %v69 = vunpack.c.l.b16 %v35
    %v70 = vunpack.c.l.b16 %v36
    %v71 = vunpack.c.l.b16 %v37
    %v72 = vunpack.c.l.b16 %v38
    %v73 = vpack.c.b16 %v58, %v57
    %v74 = vpack.c.b16 %v60, %v59
    %v75 = vpack.c.b16 %v62, %v61
    %v76 = vpack.c.b16 %v64, %v63
    %v77 = vpack.c.b16 %v66, %v65
    %v78 = vpack.c.b16 %v68, %v67
    %v79 = vpack.c.b16 %v70, %v69
    %v80 = vpack.c.b16 %v72, %v71
    %v83 = vunpack.c.l.b16 %v39
    %v84 = vunpack.c.l.b16 %v40
    %v85 = vpack.c.b16 %v84, %v83
    %vm87 = vcmask 130048
    %v89 = vsel %vm87, %v73, 0
    %v92 = vsel %vm87, %v74, 0
    %v95 = vsel %vm87, %v75, 0
    %v98 = vsel %vm87, %v76, 0
    %v101 = vsel %vm87, %v77, 0
    %v104 = vsel %vm87, %v78, 0
    %v107 = vsel %vm87, %v79, 0
    %v110 = vsel %vm87, %v80, 0
    %112 = vmatprep.subr.bf16.mxu0 0
    %113 = vmatpush1.bf16.msra.mxu0 %v85
    %114 = vmatprep.subr.bf16.mxu0 0
    %115 = vmatpush1.bf16.msra.mxu0 0
    %116 = vmatprep.subr.bf16.mxu0 0
    %117 = vmatpush1.bf16.msra.mxu0 0
    %118 = vmatprep.subr.bf16.mxu0 0
    %119 = vmatpush1.bf16.msra.mxu0 0
    %120 = vmatprep.subr.bf16.mxu0 0
    %121 = vmatpush1.bf16.msra.mxu0 0
    %122 = vmatprep.subr.bf16.mxu0 0
    %123 = vmatpush1.bf16.msra.mxu0 0
    %124 = vmatprep.subr.bf16.mxu0 0
    %125 = vmatpush1.bf16.msra.mxu0 0
    %126 = vmatprep.subr.bf16.mxu0 0
    %127 = vmatpush1.bf16.msra.mxu0 0
    %128 = vmatprep.subr.bf16.mxu0 0
    %129 = vmatpush1.bf16.msra.mxu0 0
    %130 = vmatprep.subr.bf16.mxu0 0
    %131 = vmatpush1.bf16.msra.mxu0 0
    %132 = vmatprep.subr.bf16.mxu0 0
    %133 = vmatpush1.bf16.msra.mxu0 0
    %134 = vmatprep.subr.bf16.mxu0 0
    %135 = vmatpush1.bf16.msra.mxu0 0
    %136 = vmatprep.subr.bf16.mxu0 0
    %137 = vmatpush1.bf16.msra.mxu0 0
    %138 = vmatprep.subr.bf16.mxu0 0
    %139 = vmatpush1.bf16.msra.mxu0 0
    %140 = vmatprep.subr.bf16.mxu0 0
    %141 = vmatpush1.bf16.msra.mxu0 0
    %142 = vmatprep.subr.bf16.mxu0 0
    %143 = vmatpush1.bf16.msra.mxu0 0
    %144 = vmatprep.mubr.bf16.mxu0 0
    %145 = vmatmul.mubr.bf16.gmra.mrb[0].mxu0 %v89
    %v146 = vpop.f32.mrb[0].mxu0
    %v147 = vadd.f32 0.0, %v146
    %v148 = vpop.f32.mrb[0].mxu0
    %v149 = vpop.f32.mrb[0].mxu0
    %v150 = vadd.f32 0.0, %v149
    %v151 = vpop.f32.mrb[0].mxu0
    %152 = vmatprep.mubr.bf16.mxu0 0
    %153 = vmatmul.mubr.bf16.gmra.mrb[0].mxu0 %v92
    %v154 = vpop.f32.mrb[0].mxu0
    %v155 = vadd.f32 0.0, %v154
    %v156 = vpop.f32.mrb[0].mxu0
    %v157 = vpop.f32.mrb[0].mxu0
    %v158 = vadd.f32 0.0, %v157
    %v159 = vpop.f32.mrb[0].mxu0
    %160 = vmatprep.mubr.bf16.mxu0 0
    %161 = vmatmul.mubr.bf16.gmra.mrb[0].mxu0 %v95
    %v162 = vpop.f32.mrb[0].mxu0
    %v163 = vadd.f32 0.0, %v162
    %v164 = vpop.f32.mrb[0].mxu0
    %v165 = vpop.f32.mrb[0].mxu0
    %v166 = vadd.f32 0.0, %v165
    %v167 = vpop.f32.mrb[0].mxu0
    %168 = vmatprep.mubr.bf16.mxu0 0
    %169 = vmatmul.mubr.bf16.gmra.mrb[0].mxu0 %v98
    %v170 = vpop.f32.mrb[0].mxu0
    %v171 = vadd.f32 0.0, %v170
    %v172 = vpop.f32.mrb[0].mxu0
    %v173 = vpop.f32.mrb[0].mxu0
    %v174 = vadd.f32 0.0, %v173
    %v175 = vpop.f32.mrb[0].mxu0
    %176 = vmatprep.mubr.bf16.mxu0 0
    %177 = vmatmul.mubr.bf16.gmra.mrb[0].mxu0 %v101
    %v178 = vpop.f32.mrb[0].mxu0
    %v179 = vadd.f32 0.0, %v178
    %v180 = vpop.f32.mrb[0].mxu0
    %v181 = vpop.f32.mrb[0].mxu0
    %v182 = vadd.f32 0.0, %v181
    %v183 = vpop.f32.mrb[0].mxu0
    %184 = vmatprep.mubr.bf16.mxu0 0
    %185 = vmatmul.mubr.bf16.gmra.mrb[0].mxu0 %v104
    %v186 = vpop.f32.mrb[0].mxu0
    %v187 = vadd.f32 0.0, %v186
    %v188 = vpop.f32.mrb[0].mxu0
    %v189 = vpop.f32.mrb[0].mxu0
    %v190 = vadd.f32 0.0, %v189
    %v191 = vpop.f32.mrb[0].mxu0
    %192 = vmatprep.mubr.bf16.mxu0 0
    %193 = vmatmul.mubr.bf16.gmra.mrb[0].mxu0 %v107
    %v194 = vpop.f32.mrb[0].mxu0
    %v195 = vadd.f32 0.0, %v194
    %v196 = vpop.f32.mrb[0].mxu0
    %v197 = vpop.f32.mrb[0].mxu0
    %v198 = vadd.f32 0.0, %v197
    %v199 = vpop.f32.mrb[0].mxu0
    %200 = vmatprep.mubr.bf16.mxu0 0
    %201 = vmatmul.mubr.bf16.gmra.mrb[0].mxu0 %v110
    %v202 = vpop.f32.mrb[0].mxu0
    %v203 = vadd.f32 0.0, %v202
    %v204 = vpop.f32.mrb[0].mxu0
    %v205 = vpop.f32.mrb[0].mxu0
    %v206 = vadd.f32 0.0, %v205
    %v207 = vpop.f32.mrb[0].mxu0
    %208 = vdwg.mxu0
    %v209 = vpack.c.bf16 %v150, %v147
    %v210 = vpack.c.bf16 %v158, %v155
    %v211 = vpack.c.bf16 %v166, %v163
    %v212 = vpack.c.bf16 %v174, %v171
    %v213 = vpack.c.bf16 %v182, %v179
    %v214 = vpack.c.bf16 %v190, %v187
    %v215 = vpack.c.bf16 %v198, %v195
    %v216 = vpack.c.bf16 %v206, %v203
    %v225 = vunpack.c.l.b16 %v209
    %v226 = vunpack.c.h.b16 %v209
    %v227 = vunpack.c.l.b16 %v210
    %v228 = vunpack.c.h.b16 %v210
    %v229 = vunpack.c.l.b16 %v211
    %v230 = vunpack.c.h.b16 %v211
    %v231 = vunpack.c.l.b16 %v212
    %v232 = vunpack.c.h.b16 %v212
    %v233 = vunpack.c.l.b16 %v213
    %v234 = vunpack.c.h.b16 %v213
    %v235 = vunpack.c.l.b16 %v214
    %v236 = vunpack.c.h.b16 %v214
    %v237 = vunpack.c.l.b16 %v215
    %v238 = vunpack.c.h.b16 %v215
    %v239 = vunpack.c.l.b16 %v216
    %v240 = vunpack.c.h.b16 %v216
    %v241 = vpack.c.b16 %v225, %v225
    %v242 = vpack.c.b16 %v226, %v226
    %v243 = vpack.c.b16 %v227, %v227
    %v244 = vpack.c.b16 %v228, %v228
    %v245 = vpack.c.b16 %v229, %v229
    %v246 = vpack.c.b16 %v230, %v230
    %v247 = vpack.c.b16 %v231, %v231
    %v248 = vpack.c.b16 %v232, %v232
    %v249 = vpack.c.b16 %v233, %v233
    %v250 = vpack.c.b16 %v234, %v234
    %v251 = vpack.c.b16 %v235, %v235
    %v252 = vpack.c.b16 %v236, %v236
    %v253 = vpack.c.b16 %v237, %v237
    %v254 = vpack.c.b16 %v238, %v238
    %v255 = vpack.c.b16 %v239, %v239
    %v256 = vpack.c.b16 %v240, %v240
    %273 = vst [vmem:[#allocation2] sm:$0xf] %v241
    %274 = vst [vmem:[#allocation2 + $0x4] sm:$0xf] %v242
    %275 = vst [vmem:[#allocation2 + $0x8] sm:$0xf] %v243
    %276 = vst [vmem:[#allocation2 + $0xc] sm:$0xf] %v244
    %277 = vst [vmem:[#allocation2 + $0x10] sm:$0xf] %v245
    %278 = vst [vmem:[#allocation2 + $0x14] sm:$0xf] %v246
    %279 = vst [vmem:[#allocation2 + $0x18] sm:$0xf] %v247
    %280 = vst [vmem:[#allocation2 + $0x1c] sm:$0xf] %v248
    %281 = vst [vmem:[#allocation2 + $0x20] sm:$0xf] %v249
    %282 = vst [vmem:[#allocation2 + $0x24] sm:$0xf] %v250
    %283 = vst [vmem:[#allocation2 + $0x28] sm:$0xf] %v251
    %284 = vst [vmem:[#allocation2 + $0x2c] sm:$0xf] %v252
    %285 = vst [vmem:[#allocation2 + $0x30] sm:$0xf] %v253
    %286 = vst [vmem:[#allocation2 + $0x34] sm:$0xf] %v254
    %287 = vst [vmem:[#allocation2 + $0x38] sm:$0xf] %v255
    %288 = vst [vmem:[#allocation2 + $0x3c] sm:$0xf] %v256
    %v289 = vld [vmem:[%s2] sm:$0x1]
    %v291 = vlaneseq
    %v292 = vshrl.u32 %v291, 7
    %v293 = vsub.s32 0, %v292
    %v294 = vrot.slane %v289, %v293
    %v296 = vmul.f32 %v147, %v294
    %v297 = vmul.f32 %v150, %v294
    %v298 = vmul.f32 %v155, %v294
    %v299 = vmul.f32 %v158, %v294
    %v300 = vmul.f32 %v163, %v294
    %v301 = vmul.f32 %v166, %v294
    %v302 = vmul.f32 %v171, %v294
    %v303 = vmul.f32 %v174, %v294
    %v304 = vmul.f32 %v179, %v294
    %v305 = vmul.f32 %v182, %v294
    %v306 = vmul.f32 %v187, %v294
    %v307 = vmul.f32 %v190, %v294
    %v308 = vmul.f32 %v195, %v294
    %v309 = vmul.f32 %v198, %v294
    %v310 = vmul.f32 %v203, %v294
    %v311 = vmul.f32 %v206, %v294
    %312 = vadd.xlane.f32.xlu0 %v296
    %v313 = vpop.xlane.xlu0 %312
    %314 = vadd.xlane.f32.xlu0 %v297
    %v315 = vpop.xlane.xlu0 %314
    %316 = vadd.xlane.f32.xlu0 %v298
    %v317 = vpop.xlane.xlu0 %316
    %318 = vadd.xlane.f32.xlu0 %v299
    %v319 = vpop.xlane.xlu0 %318
    %320 = vadd.xlane.f32.xlu0 %v300
    %v321 = vpop.xlane.xlu0 %320
    %322 = vadd.xlane.f32.xlu0 %v301
    %v323 = vpop.xlane.xlu0 %322
    %324 = vadd.xlane.f32.xlu0 %v302
    %v325 = vpop.xlane.xlu0 %324
    %326 = vadd.xlane.f32.xlu0 %v303
    %v327 = vpop.xlane.xlu0 %326
    %328 = vadd.xlane.f32.xlu0 %v304
    %v329 = vpop.xlane.xlu0 %328
    %330 = vadd.xlane.f32.xlu0 %v305
    %v331 = vpop.xlane.xlu0 %330
    %332 = vadd.xlane.f32.xlu0 %v306
    %v333 = vpop.xlane.xlu0 %332
    %334 = vadd.xlane.f32.xlu0 %v307
    %v335 = vpop.xlane.xlu0 %334
    %336 = vadd.xlane.f32.xlu0 %v308
    %v337 = vpop.xlane.xlu0 %336
    %338 = vadd.xlane.f32.xlu0 %v309
    %v339 = vpop.xlane.xlu0 %338
    %340 = vadd.xlane.f32.xlu0 %v310
    %v341 = vpop.xlane.xlu0 %340
    %342 = vadd.xlane.f32.xlu0 %v311
    %v343 = vpop.xlane.xlu0 %342
    %344 = vxpose.xlu0.b32.start [1/16] %v313, 128
    %345 = vxpose.xlu0.b32.cont [2/16] %v315, 128
    %346 = vxpose.xlu0.b32.cont [3/16] %v317, 128
    %347 = vxpose.xlu0.b32.cont [4/16] %v319, 128
    %348 = vxpose.xlu0.b32.cont [5/16] %v321, 128
    %349 = vxpose.xlu0.b32.cont [6/16] %v323, 128
    %350 = vxpose.xlu0.b32.cont [7/16] %v325, 128
    %351 = vxpose.xlu0.b32.cont [8/16] %v327, 128
    %352 = vxpose.xlu0.b32.cont [9/16] %v329, 128
    %353 = vxpose.xlu0.b32.cont [10/16] %v331, 128
    %354 = vxpose.xlu0.b32.cont [11/16] %v333, 128
    %355 = vxpose.xlu0.b32.cont [12/16] %v335, 128
    %356 = vxpose.xlu0.b32.cont [13/16] %v337, 128
    %357 = vxpose.xlu0.b32.cont [14/16] %v339, 128
    %358 = vxpose.xlu0.b32.cont [15/16] %v341, 128
    %359 = vxpose.xlu0.b32.end [16/16] %v343, 128
    %v360 = vpop.trf.xlu0
    %v361 = vpop.trf.xlu0
    %v362 = vpop.trf.xlu0
    %v363 = vpop.trf.xlu0
    %v364 = vpop.trf.xlu0
    %v365 = vpop.trf.xlu0
    %v366 = vpop.trf.xlu0
    %v367 = vpop.trf.xlu0
    %v368 = vpop.trf.xlu0
    %v369 = vpop.trf.xlu0
    %v370 = vpop.trf.xlu0
    %v371 = vpop.trf.xlu0
    %v372 = vpop.trf.xlu0
    %v373 = vpop.trf.xlu0
    %v374 = vpop.trf.xlu0
    %v375 = vpop.trf.xlu0
    %376 = vst [vmem:[#allocation4] sm:$0x1] %v360
    %v377 = vld [vmem:[%s3] sm:$0x1]
    %v379 = vlaneseq
    %v380 = vshrl.u32 %v379, 7
    %v381 = vsub.s32 0, %v380
    %v382 = vrot.slane %v377, %v381
    %v384 = vmul.f32 %v147, %v382
    %v385 = vmul.f32 %v150, %v382
    %v386 = vmul.f32 %v155, %v382
    %v387 = vmul.f32 %v158, %v382
    %v388 = vmul.f32 %v163, %v382
    %v389 = vmul.f32 %v166, %v382
    %v390 = vmul.f32 %v171, %v382
    %v391 = vmul.f32 %v174, %v382
    %v392 = vmul.f32 %v179, %v382
    %v393 = vmul.f32 %v182, %v382
    %v394 = vmul.f32 %v187, %v382
    %v395 = vmul.f32 %v190, %v382
    %v396 = vmul.f32 %v195, %v382
    %v397 = vmul.f32 %v198, %v382
    %v398 = vmul.f32 %v203, %v382
    %v399 = vmul.f32 %v206, %v382
    %400 = vadd.xlane.f32.xlu0 %v384
    %v401 = vpop.xlane.xlu0 %400
    %402 = vadd.xlane.f32.xlu0 %v385
    %v403 = vpop.xlane.xlu0 %402
    %404 = vadd.xlane.f32.xlu0 %v386
    %v405 = vpop.xlane.xlu0 %404
    %406 = vadd.xlane.f32.xlu0 %v387
    %v407 = vpop.xlane.xlu0 %406
    %408 = vadd.xlane.f32.xlu0 %v388
    %v409 = vpop.xlane.xlu0 %408
    %410 = vadd.xlane.f32.xlu0 %v389
    %v411 = vpop.xlane.xlu0 %410
    %412 = vadd.xlane.f32.xlu0 %v390
    %v413 = vpop.xlane.xlu0 %412
    %414 = vadd.xlane.f32.xlu0 %v391
    %v415 = vpop.xlane.xlu0 %414
    %416 = vadd.xlane.f32.xlu0 %v392
    %v417 = vpop.xlane.xlu0 %416
    %418 = vadd.xlane.f32.xlu0 %v393
    %v419 = vpop.xlane.xlu0 %418
    %420 = vadd.xlane.f32.xlu0 %v394
    %v421 = vpop.xlane.xlu0 %420
    %422 = vadd.xlane.f32.xlu0 %v395
    %v423 = vpop.xlane.xlu0 %422
    %424 = vadd.xlane.f32.xlu0 %v396
    %v425 = vpop.xlane.xlu0 %424
    %426 = vadd.xlane.f32.xlu0 %v397
    %v427 = vpop.xlane.xlu0 %426
    %428 = vadd.xlane.f32.xlu0 %v398
    %v429 = vpop.xlane.xlu0 %428
    %430 = vadd.xlane.f32.xlu0 %v399
    %v431 = vpop.xlane.xlu0 %430
    %432 = vxpose.xlu0.b32.start [1/16] %v401, 128
    %433 = vxpose.xlu0.b32.cont [2/16] %v403, 128
    %434 = vxpose.xlu0.b32.cont [3/16] %v405, 128
    %435 = vxpose.xlu0.b32.cont [4/16] %v407, 128
    %436 = vxpose.xlu0.b32.cont [5/16] %v409, 128
    %437 = vxpose.xlu0.b32.cont [6/16] %v411, 128
    %438 = vxpose.xlu0.b32.cont [7/16] %v413, 128
    %439 = vxpose.xlu0.b32.cont [8/16] %v415, 128
    %440 = vxpose.xlu0.b32.cont [9/16] %v417, 128
    %441 = vxpose.xlu0.b32.cont [10/16] %v419, 128
    %442 = vxpose.xlu0.b32.cont [11/16] %v421, 128
    %443 = vxpose.xlu0.b32.cont [12/16] %v423, 128
    %444 = vxpose.xlu0.b32.cont [13/16] %v425, 128
    %445 = vxpose.xlu0.b32.cont [14/16] %v427, 128
    %446 = vxpose.xlu0.b32.cont [15/16] %v429, 128
    %447 = vxpose.xlu0.b32.end [16/16] %v431, 128
    %v448 = vpop.trf.xlu0
    %v449 = vpop.trf.xlu0
    %v450 = vpop.trf.xlu0
    %v451 = vpop.trf.xlu0
    %v452 = vpop.trf.xlu0
    %v453 = vpop.trf.xlu0
    %v454 = vpop.trf.xlu0
    %v455 = vpop.trf.xlu0
    %v456 = vpop.trf.xlu0
    %v457 = vpop.trf.xlu0
    %v458 = vpop.trf.xlu0
    %v459 = vpop.trf.xlu0
    %v460 = vpop.trf.xlu0
    %v461 = vpop.trf.xlu0
    %v462 = vpop.trf.xlu0
    %v463 = vpop.trf.xlu0
    %464 = vst [vmem:[#allocation6] sm:$0x1] %v448
    // Predicated region
    $region18: #{tpu_custom_call.1} parent=1 // pred_check
      _
    $region19: #{tpu_custom_call.1} parent=1 // pred_check_branch
      %466 = sbr.rel (0) target = $region21
    $region20: #{tpu_custom_call.1} parent=1 // pred_region
      %s468 = ssub.s32 1024, 1024
      %469 = vsyncadd [#allocation3], %s468
      %s470 = sshll.u32 [#allocation2], 4
      %s471 = int_to_ptr.vmem [resolvable:$true] %s470
      %476 = dma.vmem_to_hbm [thread:$0]  %s471, 1024, %s4, [#allocation3], 64, 64, 4
    $region21: #{tpu_custom_call.1} parent=1 // pred_fallthru
      _
    // Predicated region
    $region22: #{tpu_custom_call.1} parent=1 // pred_check
      _
    $region23: #{tpu_custom_call.1} parent=1 // pred_check_branch
      %478 = sbr.rel (0) target = $region25
    $region24: #{tpu_custom_call.1} parent=1 // pred_region
      %s480 = ssub.s32 16, 16
      %481 = vsyncadd [#allocation5], %s480
      %s483 = sshll.u32 [#allocation4], 4
      %s484 = int_to_ptr.vmem [resolvable:$true] %s483
      %486 = dma.vmem_to_hbm [thread:$0]  %s484, 16, %s5, [#allocation5]
    $region25: #{tpu_custom_call.1} parent=1 // pred_fallthru
      _
    // Predicated region
    $region26: #{tpu_custom_call.1} parent=1 // pred_check
      _
    $region27: #{tpu_custom_call.1} parent=1 // pred_check_branch
      %488 = sbr.rel (0) target = $region29
    $region28: #{tpu_custom_call.1} parent=1 // pred_region
      %s490 = ssub.s32 16, 16
      %491 = vsyncadd [#allocation5], %s490
      %s493 = sshll.u32 [#allocation6], 4
      %s494 = int_to_ptr.vmem [resolvable:$true] %s493
      %496 = dma.vmem_to_hbm [thread:$0]  %s494, 16, %s6, [#allocation5]
    $region29: #{tpu_custom_call.1} parent=1 // pred_fallthru
      _
    // Predicated region
    $region30: #{tpu_custom_call.1} parent=1 // pred_check
      _
    $region31: #{tpu_custom_call.1} parent=1 // pred_check_branch
      %498 = sbr.rel (0) target = $region33
    $region32: #{tpu_custom_call.1} parent=1 // pred_region
      %499 = dma.done [#allocation3], 1024
    $region33: #{tpu_custom_call.1} parent=1 // pred_fallthru
      _
    // Predicated region
    $region34: #{tpu_custom_call.1} parent=1 // pred_check
      _
    $region35: #{tpu_custom_call.1} parent=1 // pred_check_branch
      %501 = sbr.rel (0) target = $region37
    $region36: #{tpu_custom_call.1} parent=1 // pred_region
      %502 = dma.done [#allocation5], 16
    $region37: #{tpu_custom_call.1} parent=1 // pred_fallthru
      _
    // Predicated region
    $region38: #{tpu_custom_call.1} parent=1 // pred_check
      _
    $region39: #{tpu_custom_call.1} parent=1 // pred_check_branch
      %504 = sbr.rel (0) target = $region41
    $region40: #{tpu_custom_call.1} parent=1 // pred_region
      %505 = dma.done [#allocation5], 16
    $region41: #{tpu_custom_call.1} parent=1 // pred_fallthru
      _
    %506 = vsyncpa [#allocation3], 1
    %507 = vsyncpa [#allocation5], 1

</llo_original>
